<compile_context>
chip_gen: v5e
topology: v5e:2x2
jax: 0.10.0
libtpu: 0.0.40
codegen_flags: <defaults>
</compile_context>

<pallas_src>
import math
from functools import partial

import jax
import jax.numpy as jnp
from jax.experimental import pallas as pl
from jax.experimental.pallas import tpu as pltpu


def _make_kernel(compute_dtype):
    cd = compute_dtype

    def kernel(s_ref, a_ref, w1s_ref, w1a_ref, b1_ref, w2_ref, b2_ref,
               w3r_ref, b3_ref, o_ref):
        s = s_ref[...].astype(cd)
        a = a_ref[...].astype(cd)
        # Layer 1: concat folded into two matmuls on the split W1.
        h1 = (jnp.dot(s, w1s_ref[...].astype(cd),
                      preferred_element_type=jnp.float32)
              + jnp.dot(a, w1a_ref[...].astype(cd),
                        preferred_element_type=jnp.float32)
              + b1_ref[...])
        h1 = jnp.maximum(h1, 0.0)
        # Layer 2.
        h2 = jnp.dot(h1.astype(cd), w2_ref[...].astype(cd),
                     preferred_element_type=jnp.float32) + b2_ref[...]
        h2 = jnp.maximum(h2, 0.0)
        # Layer 3 (out_features == 1): contract the hidden axis of h2 against
        # the w3 row (A @ B^T).  w3 arrives pre-broadcast to 8 identical
        # sublane rows so the LHS fills a full sublane tile; all result rows
        # are identical, row 0 is stored as a lane-dense [1, TB] output row.
        q8 = jax.lax.dot_general(
            w3r_ref[...].astype(cd), h2.astype(cd),
            dimension_numbers=(((1,), (1,)), ((), ())),
            preferred_element_type=jnp.float32)            # [8, TB]
        o_ref[...] = (q8[0:1, :] + b3_ref[...]).astype(o_ref.dtype)

    return kernel


@partial(jax.jit, static_argnames=("block_b", "compute_dtype"))
def qnetwork_forward(state, action, params, *, block_b=512,
                     compute_dtype=jnp.float32):
    """Pallas implementation of QNetwork.forward(state, action) -> [B, 1]."""
    assert block_b % 128 == 0 and block_b > 0
    w1, b1, w2, b2, w3, b3 = params
    B, S = state.shape
    A = action.shape[1]
    H = w2.shape[0]
    assert w1.shape[0] == S + A

    # Split W1 so the concatenation never materializes.
    w1_s = w1[:S, :]
    w1_a = w1[S:, :]
    # Lane-dense row layout for the last layer; 8 identical sublane rows.
    w3_rows = jnp.broadcast_to(jnp.reshape(w3, (1, H)), (8, H))
    b3_m = jnp.reshape(b3, (1, 1))

    # Batch tile: multiple of 128 (lane-dense transposed output), <= block_b.
    TB = min(block_b, max(128, pl.next_power_of_2(B)))
    grid_b = pl.cdiv(B, TB)
    B_pad = grid_b * TB
    if B_pad != B:
        pad = B_pad - B
        state = jnp.pad(state, ((0, pad), (0, 0)))
        action = jnp.pad(action, ((0, pad), (0, 0)))

    batch_spec = lambda feat: pl.BlockSpec((TB, feat), lambda i: (i, 0))
    resident = lambda shape: pl.BlockSpec(shape, lambda i: (0, 0))

    out = pl.pallas_call(
        _make_kernel(compute_dtype),
        out_shape=jax.ShapeDtypeStruct((1, B_pad), jnp.float32),
        grid=(grid_b,),
        in_specs=[
            batch_spec(S),            # state block   [TB, S]
            batch_spec(A),            # action block  [TB, A]
            resident((S, H)),         # W1_s  (VMEM-resident across grid)
            resident((A, H)),         # W1_a
            resident((1, H)),         # b1
            resident((H, H)),         # W2
            resident((1, H)),         # b2
            resident((8, H)),         # w3 rows
            resident((1, 1)),         # b3
        ],
        out_specs=pl.BlockSpec((1, TB), lambda i: (0, i)),
        compiler_params=pltpu.CompilerParams(
            dimension_semantics=("parallel",)),
    )(state, action, w1_s, w1_a, b1, w2, b2, w3_rows, b3_m)

    # Transposed lane-dense output back to the PyTorch [B, 1] shape.
    return out[:, :B].reshape(B, 1)


def init_params(key, input_dim, hidden_dim, init_w=0.003):
    """Matches the PyTorch module's shapes/init (weights as [in, out]).

    nn.Linear default: U(-1/sqrt(fan_in), 1/sqrt(fan_in)); linear3 overridden
    to U(-init_w, init_w).
    """
    k1, k2, k3, k4, k5, k6 = jax.random.split(key, 6)
    s1 = 1.0 / math.sqrt(input_dim)
    s2 = 1.0 / math.sqrt(hidden_dim)
    w1 = jax.random.uniform(k1, (input_dim, hidden_dim), jnp.float32, -s1, s1)
    b1 = jax.random.uniform(k2, (1, hidden_dim), jnp.float32, -s1, s1)
    w2 = jax.random.uniform(k3, (hidden_dim, hidden_dim), jnp.float32, -s2, s2)
    b2 = jax.random.uniform(k4, (1, hidden_dim), jnp.float32, -s2, s2)
    w3 = jax.random.uniform(k5, (hidden_dim, 1), jnp.float32, -init_w, init_w)
    b3 = jax.random.uniform(k6, (1, 1), jnp.float32, -init_w, init_w)
    return (w1, b1, w2, b2, w3, b3)


def _reference(state, action, params):
    w1, b1, w2, b2, w3, b3 = params
    x = jnp.concatenate([state, action], axis=1)
    x = jnp.maximum(x @ w1 + b1, 0.0)
    x = jnp.maximum(x @ w2 + b2, 0.0)
    return x @ w3 + b3


if __name__ == "__main__":
    key = jax.random.PRNGKey(0)
    k_state, k_action, k_params, k_state2, k_action2 = jax.random.split(key, 5)

    state_dim, action_dim, hidden_dim = 12, 4, 32
    input_dim = state_dim + action_dim  # 16

    params = init_params(k_params, input_dim, hidden_dim, init_w=0.003)

    # Small batch (single grid block, padded to one 128-row tile).
    batch = 8
    state = jax.random.normal(k_state, (batch, state_dim), jnp.float32)
    action = jax.random.normal(k_action, (batch, action_dim), jnp.float32)

    q = jax.block_until_ready(qnetwork_forward(state, action, params))
    q_ref = _reference(state, action, params)
    assert q.shape == (batch, 1), q.shape
    assert jnp.allclose(q, q_ref, atol=1e-5, rtol=1e-5), "f32 mismatch vs ref"

    # Ragged larger batch exercising the batch-parallel grid
    # (3 blocks of 128 rows, last block zero-padded; weights stay resident).
    batch2 = 300
    state2 = jax.random.normal(k_state2, (batch2, state_dim), jnp.float32)
    action2 = jax.random.normal(k_action2, (batch2, action_dim), jnp.float32)
    q2 = jax.block_until_ready(
        qnetwork_forward(state2, action2, params, block_b=128))
    q2_ref = _reference(state2, action2, params)
    assert q2.shape == (batch2, 1), q2.shape
    assert jnp.allclose(q2, q2_ref, atol=1e-5, rtol=1e-5), "grid mismatch"

    # bf16 MXU-operand path (v6e/v7x): f32 accumulation + f32 bias/ReLU.
    q_bf16 = jax.block_until_ready(
        qnetwork_forward(state, action, params, compute_dtype=jnp.bfloat16))
    assert q_bf16.shape == (batch, 1)
    assert jnp.allclose(q_bf16, q_ref, atol=1e-2), "bf16 path off vs ref"

    print("KERNEL_OK")
</pallas_src>

<mosaic_0001>
module attributes {stable_mosaic.version = 11 : i64} {
  func.func @kernel(%arg0: i32, %arg1: memref<128x12xf32, #tpu.memory_space<vmem>>, %arg2: memref<128x4xf32, #tpu.memory_space<vmem>>, %arg3: memref<12x32xf32, #tpu.memory_space<vmem>>, %arg4: memref<4x32xf32, #tpu.memory_space<vmem>>, %arg5: memref<1x32xf32, #tpu.memory_space<vmem>>, %arg6: memref<32x32xf32, #tpu.memory_space<vmem>>, %arg7: memref<1x32xf32, #tpu.memory_space<vmem>>, %arg8: memref<8x32xf32, #tpu.memory_space<vmem>>, %arg9: memref<1x1xf32, #tpu.memory_space<vmem>>, %arg10: memref<1x128xf32, #tpu.memory_space<vmem>>) attributes {dimension_semantics = [#tpu.dimension_semantics<parallel>], iteration_bounds = array<i64: 1>, scalar_prefetch = 0 : i64, scratch_operands = 0 : i64, tpu.core_type = #tpu.core_type<tc>, window_params = [{transform_indices = @transform_0, window_bounds = array<i64: 128, 12>}, {transform_indices = @transform_1, window_bounds = array<i64: 128, 4>}, {pipeline_mode = #tpu.pipeline_mode<synchronous>, transform_indices = @transform_2, window_bounds = array<i64: 12, 32>}, {pipeline_mode = #tpu.pipeline_mode<synchronous>, transform_indices = @transform_3, window_bounds = array<i64: 4, 32>}, {pipeline_mode = #tpu.pipeline_mode<synchronous>, transform_indices = @transform_4, window_bounds = array<i64: 1, 32>}, {pipeline_mode = #tpu.pipeline_mode<synchronous>, transform_indices = @transform_5, window_bounds = array<i64: 32, 32>}, {pipeline_mode = #tpu.pipeline_mode<synchronous>, transform_indices = @transform_6, window_bounds = array<i64: 1, 32>}, {pipeline_mode = #tpu.pipeline_mode<synchronous>, transform_indices = @transform_7, window_bounds = array<i64: 8, 32>}, {pipeline_mode = #tpu.pipeline_mode<synchronous>, transform_indices = @transform_8, window_bounds = array<i64: 1, 1>}, {transform_indices = @transform_9, window_bounds = array<i64: 1, 128>}]} {
    %c0 = arith.constant 0 : index
    %c0_0 = arith.constant 0 : index
    %0 = vector.load %arg1[%c0, %c0_0] : memref<128x12xf32, #tpu.memory_space<vmem>>, vector<128x12xf32>
    %c0_1 = arith.constant 0 : index
    %c0_2 = arith.constant 0 : index
    %1 = vector.load %arg2[%c0_1, %c0_2] : memref<128x4xf32, #tpu.memory_space<vmem>>, vector<128x4xf32>
    %c0_3 = arith.constant 0 : index
    %c0_4 = arith.constant 0 : index
    %2 = vector.load %arg3[%c0_3, %c0_4] : memref<12x32xf32, #tpu.memory_space<vmem>>, vector<12x32xf32>
    %cst = arith.constant dense<0.000000e+00> : vector<128x32xf32>
    %3 = tpu.matmul %0, %2, %cst {dimension_numbers = #tpu.dot_dimension_numbers<[1], [0], [0], [1], [0, 0, 1, 1], [], []>} : vector<128x12xf32>, vector<12x32xf32>, vector<128x32xf32> -> vector<128x32xf32>
    %c0_5 = arith.constant 0 : index
    %c0_6 = arith.constant 0 : index
    %4 = vector.load %arg4[%c0_5, %c0_6] : memref<4x32xf32, #tpu.memory_space<vmem>>, vector<4x32xf32>
    %cst_7 = arith.constant dense<0.000000e+00> : vector<128x32xf32>
    %5 = tpu.matmul %1, %4, %cst_7 {dimension_numbers = #tpu.dot_dimension_numbers<[1], [0], [0], [1], [0, 0, 1, 1], [], []>} : vector<128x4xf32>, vector<4x32xf32>, vector<128x32xf32> -> vector<128x32xf32>
    %6 = arith.addf %3, %5 : vector<128x32xf32>
    %c0_8 = arith.constant 0 : index
    %c0_9 = arith.constant 0 : index
    %7 = vector.load %arg5[%c0_8, %c0_9] : memref<1x32xf32, #tpu.memory_space<vmem>>, vector<1x32xf32>
    %8 = vector.broadcast %7 : vector<1x32xf32> to vector<128x32xf32>
    %9 = arith.addf %6, %8 : vector<128x32xf32>
    %cst_10 = arith.constant 0.000000e+00 : f32
    %10 = vector.broadcast %cst_10 : f32 to vector<128x32xf32>
    %11 = arith.maximumf %9, %10 : vector<128x32xf32>
    %c0_11 = arith.constant 0 : index
    %c0_12 = arith.constant 0 : index
    %12 = vector.load %arg6[%c0_11, %c0_12] : memref<32x32xf32, #tpu.memory_space<vmem>>, vector<32x32xf32>
    %cst_13 = arith.constant dense<0.000000e+00> : vector<128x32xf32>
    %13 = tpu.matmul %11, %12, %cst_13 {dimension_numbers = #tpu.dot_dimension_numbers<[1], [0], [0], [1], [0, 0, 1, 1], [], []>} : vector<128x32xf32>, vector<32x32xf32>, vector<128x32xf32> -> vector<128x32xf32>
    %c0_14 = arith.constant 0 : index
    %c0_15 = arith.constant 0 : index
    %14 = vector.load %arg7[%c0_14, %c0_15] : memref<1x32xf32, #tpu.memory_space<vmem>>, vector<1x32xf32>
    %15 = vector.broadcast %14 : vector<1x32xf32> to vector<128x32xf32>
    %16 = arith.addf %13, %15 : vector<128x32xf32>
    %cst_16 = arith.constant 0.000000e+00 : f32
    %17 = vector.broadcast %cst_16 : f32 to vector<128x32xf32>
    %18 = arith.maximumf %16, %17 : vector<128x32xf32>
    %c0_17 = arith.constant 0 : index
    %c0_18 = arith.constant 0 : index
    %19 = vector.load %arg8[%c0_17, %c0_18] : memref<8x32xf32, #tpu.memory_space<vmem>>, vector<8x32xf32>
    %cst_19 = arith.constant dense<0.000000e+00> : vector<8x128xf32>
    %20 = tpu.matmul %19, %18, %cst_19 {dimension_numbers = #tpu.dot_dimension_numbers<[1], [1], [0], [0], [0, 0, 1, 0], [], []>} : vector<8x32xf32>, vector<128x32xf32>, vector<8x128xf32> -> vector<8x128xf32>
    %21 = vector.extract_strided_slice %20 {offsets = [0, 0], sizes = [1, 128], strides = [1, 1]} : vector<8x128xf32> to vector<1x128xf32>
    %c0_20 = arith.constant 0 : index
    %c0_21 = arith.constant 0 : index
    %22 = vector.load %arg9[%c0_20, %c0_21] : memref<1x1xf32, #tpu.memory_space<vmem>>, vector<1x1xf32>
    %23 = vector.broadcast %22 : vector<1x1xf32> to vector<1x128xf32>
    %24 = arith.addf %21, %23 : vector<1x128xf32>
    %c0_22 = arith.constant 0 : index
    %c0_23 = arith.constant 0 : index
    %25 = vector.load %arg10[%c0_22, %c0_23] : memref<1x128xf32, #tpu.memory_space<vmem>>, vector<1x128xf32>
    tpu.vector_store %arg10[%c0_22, %c0_23], %24 {strides = array<i32>} : memref<1x128xf32, #tpu.memory_space<vmem>>, vector<1x128xf32>,
    return
  }
  func.func @transform_0(%arg0: i32) -> (i32, i32) {
    %c0_i32 = arith.constant 0 : i32
    %c0_i32_0 = arith.constant 0 : i32
    return %arg0, %c0_i32 : i32, i32
  }
  func.func @transform_1(%arg0: i32) -> (i32, i32) {
    %c0_i32 = arith.constant 0 : i32
    %c0_i32_0 = arith.constant 0 : i32
    return %arg0, %c0_i32 : i32, i32
  }
  func.func @transform_2(%arg0: i32) -> (i32, i32) {
    %c0_i32 = arith.constant 0 : i32
    %c0_i32_0 = arith.constant 0 : i32
    %c0_i32_1 = arith.constant 0 : i32
    return %c0_i32, %c0_i32_0 : i32, i32
  }
  func.func @transform_3(%arg0: i32) -> (i32, i32) {
    %c0_i32 = arith.constant 0 : i32
    %c0_i32_0 = arith.constant 0 : i32
    %c0_i32_1 = arith.constant 0 : i32
    return %c0_i32, %c0_i32_0 : i32, i32
  }
  func.func @transform_4(%arg0: i32) -> (i32, i32) {
    %c0_i32 = arith.constant 0 : i32
    %c0_i32_0 = arith.constant 0 : i32
    %c0_i32_1 = arith.constant 0 : i32
    return %c0_i32, %c0_i32_0 : i32, i32
  }
  func.func @transform_5(%arg0: i32) -> (i32, i32) {
    %c0_i32 = arith.constant 0 : i32
    %c0_i32_0 = arith.constant 0 : i32
    %c0_i32_1 = arith.constant 0 : i32
    return %c0_i32, %c0_i32_0 : i32, i32
  }
  func.func @transform_6(%arg0: i32) -> (i32, i32) {
    %c0_i32 = arith.constant 0 : i32
    %c0_i32_0 = arith.constant 0 : i32
    %c0_i32_1 = arith.constant 0 : i32
    return %c0_i32, %c0_i32_0 : i32, i32
  }
  func.func @transform_7(%arg0: i32) -> (i32, i32) {
    %c0_i32 = arith.constant 0 : i32
    %c0_i32_0 = arith.constant 0 : i32
    %c0_i32_1 = arith.constant 0 : i32
    return %c0_i32, %c0_i32_0 : i32, i32
  }
  func.func @transform_8(%arg0: i32) -> (i32, i32) {
    %c0_i32 = arith.constant 0 : i32
    %c0_i32_0 = arith.constant 0 : i32
    %c0_i32_1 = arith.constant 0 : i32
    return %c0_i32, %c0_i32_0 : i32, i32
  }
  func.func @transform_9(%arg0: i32) -> (i32, i32) {
    %c0_i32 = arith.constant 0 : i32
    %c0_i32_0 = arith.constant 0 : i32
    return %c0_i32, %arg0 : i32, i32
  }
}

</mosaic_0001>

<llo_original>
// kernel: qnetwork_forward.1
$region0: #{qnetwork_forward.1}
  #allocation0 [shape = 'u32[]', space=smem, size = 0x4, offset = 0x4, fixed_abs, tag = 'smem constant byte address 0x4 - core index']
  #allocation1 [shape = 'u32[72,128]{1,0:T(1,128)}', space=vmem, size = 0x9000, scoped, tag = 'internal scratch']
  #allocation2 [shape = 'f32[1,1]{1,0:T(1,128)S(1)}', space=vmem, size = 0x200, scoped, tag = 'scoped memory for qnetwork_forward.1']
  %s0 = inlined_call_operand.vmem [shape: f32[128,12], index: 0, kind: input, shape index: {}]
  %s1 = inlined_call_operand.vmem [shape: f32[128,4], index: 1, kind: input, shape index: {}]
  %s2 = inlined_call_operand.vmem [shape: f32[12,32], index: 2, kind: input, shape index: {}]
  %s3 = inlined_call_operand.vmem [shape: f32[4,32], index: 3, kind: input, shape index: {}]
  %s4 = inlined_call_operand.vmem [shape: f32[1,32], index: 4, kind: input, shape index: {}]
  %s5 = inlined_call_operand.vmem [shape: f32[32,32], index: 5, kind: input, shape index: {}]
  %s6 = inlined_call_operand.vmem [shape: f32[1,32], index: 6, kind: input, shape index: {}]
  %s7 = inlined_call_operand.vmem [shape: f32[8,32], index: 7, kind: input, shape index: {}]
  %s8 = inlined_call_operand.<no memory space> [shape: f32[1,1], index: 8, kind: input, shape index: {}]
  %s9 = inlined_call_operand.vmem [shape: f32[1,128], index: 9, kind: output, shape index: {}]
  %s10 = sld [smem:[#allocation0]]
  $region46: #{qnetwork_forward.1} parent=0
    _
  %s12 = ssub.s32 1, %s10
  %s13 = scalar_select 0, %s12, %s10
  %v14 = vstv %s8
  %15 = vst [vmem:[#allocation2] sm:$0x1] %v14
  // Predicated region
  $region2: #{qnetwork_forward.1} parent=0 // pred_check
    _
  $region3: #{qnetwork_forward.1} parent=0 // pred_check_branch
    %17 = sbr.rel (0) target = $region5
  $region4: #{qnetwork_forward.1} parent=0 // pred_region
    _
  $region5: #{qnetwork_forward.1} parent=0 // pred_fallthru
    _
  // Predicated region
  $region6: #{qnetwork_forward.1} parent=0 // pred_check
    _
  $region7: #{qnetwork_forward.1} parent=0 // pred_check_branch
    %19 = sbr.rel (0) target = $region9
  $region8: #{qnetwork_forward.1} parent=0 // pred_region
    _
  $region9: #{qnetwork_forward.1} parent=0 // pred_fallthru
    _
  // Predicated region
  $region10: #{qnetwork_forward.1} parent=0 // pred_check
    _
  $region11: #{qnetwork_forward.1} parent=0 // pred_check_branch
    %21 = sbr.rel (0) target = $region13
  $region12: #{qnetwork_forward.1} parent=0 // pred_region
    _
  $region13: #{qnetwork_forward.1} parent=0 // pred_fallthru
    _
  // Predicated region
  $region14: #{qnetwork_forward.1} parent=0 // pred_check
    _
  $region15: #{qnetwork_forward.1} parent=0 // pred_check_branch
    %23 = sbr.rel (0) target = $region17
  $region16: #{qnetwork_forward.1} parent=0 // pred_region
    _
  $region17: #{qnetwork_forward.1} parent=0 // pred_fallthru
    _
  // Predicated region
  $region18: #{qnetwork_forward.1} parent=0 // pred_check
    _
  $region19: #{qnetwork_forward.1} parent=0 // pred_check_branch
    %25 = sbr.rel (0) target = $region21
  $region20: #{qnetwork_forward.1} parent=0 // pred_region
    _
  $region21: #{qnetwork_forward.1} parent=0 // pred_fallthru
    _
  // Predicated region
  $region22: #{qnetwork_forward.1} parent=0 // pred_check
    _
  $region23: #{qnetwork_forward.1} parent=0 // pred_check_branch
    %27 = sbr.rel (0) target = $region25
  $region24: #{qnetwork_forward.1} parent=0 // pred_region
    _
  $region25: #{qnetwork_forward.1} parent=0 // pred_fallthru
    _
  // Predicated region
  $region26: #{qnetwork_forward.1} parent=0 // pred_check
    _
  $region27: #{qnetwork_forward.1} parent=0 // pred_check_branch
    %29 = sbr.rel (0) target = $region29
  $region28: #{qnetwork_forward.1} parent=0 // pred_region
    _
  $region29: #{qnetwork_forward.1} parent=0 // pred_fallthru
    _
  // Predicated region
  $region30: #{qnetwork_forward.1} parent=0 // pred_check
    _
  $region31: #{qnetwork_forward.1} parent=0 // pred_check_branch
    %31 = sbr.rel (0) target = $region33
  $region32: #{qnetwork_forward.1} parent=0 // pred_region
    _
  $region33: #{qnetwork_forward.1} parent=0 // pred_fallthru
    _
  // Predicated region
  $region34: #{qnetwork_forward.1} parent=0 // pred_check
    _
  $region35: #{qnetwork_forward.1} parent=0 // pred_check_branch
    %33 = sbr.rel (0) target = $region37
  $region36: #{qnetwork_forward.1} parent=0 // pred_region
    _
  $region37: #{qnetwork_forward.1} parent=0 // pred_fallthru
    _
  %v34 = vld [vmem:[%s0] sm:$0xff]
  %v35 = vld [vmem:[%s0 + $0x8] sm:$0xff]
  %v36 = vld [vmem:[%s0 + $0x10] sm:$0xff]
  %v37 = vld [vmem:[%s0 + $0x18] sm:$0xff]
  %v38 = vld [vmem:[%s0 + $0x20] sm:$0xff]
  %v39 = vld [vmem:[%s0 + $0x28] sm:$0xff]
  %v40 = vld [vmem:[%s0 + $0x30] sm:$0xff]
  %v41 = vld [vmem:[%s0 + $0x38] sm:$0xff]
  %v42 = vld [vmem:[%s0 + $0x40] sm:$0xff]
  %v43 = vld [vmem:[%s0 + $0x48] sm:$0xff]
  %v44 = vld [vmem:[%s0 + $0x50] sm:$0xff]
  %v45 = vld [vmem:[%s0 + $0x58] sm:$0xff]
  %v46 = vld [vmem:[%s0 + $0x60] sm:$0xff]
  %v47 = vld [vmem:[%s0 + $0x68] sm:$0xff]
  %v48 = vld [vmem:[%s0 + $0x70] sm:$0xff]
  %v49 = vld [vmem:[%s0 + $0x78] sm:$0xff]
  %v50 = vld [vmem:[%s1] sm:$0xff]
  %v51 = vld [vmem:[%s1 + $0x8] sm:$0xff]
  %v52 = vld [vmem:[%s1 + $0x10] sm:$0xff]
  %v53 = vld [vmem:[%s1 + $0x18] sm:$0xff]
  %v54 = vld [vmem:[%s1 + $0x20] sm:$0xff]
  %v55 = vld [vmem:[%s1 + $0x28] sm:$0xff]
  %v56 = vld [vmem:[%s1 + $0x30] sm:$0xff]
  %v57 = vld [vmem:[%s1 + $0x38] sm:$0xff]
  %v58 = vld [vmem:[%s1 + $0x40] sm:$0xff]
  %v59 = vld [vmem:[%s1 + $0x48] sm:$0xff]
  %v60 = vld [vmem:[%s1 + $0x50] sm:$0xff]
  %v61 = vld [vmem:[%s1 + $0x58] sm:$0xff]
  %v62 = vld [vmem:[%s1 + $0x60] sm:$0xff]
  %v63 = vld [vmem:[%s1 + $0x68] sm:$0xff]
  %v64 = vld [vmem:[%s1 + $0x70] sm:$0xff]
  %v65 = vld [vmem:[%s1 + $0x78] sm:$0xff]
  %v66 = vld [vmem:[%s2] sm:$0xff]
  %v67 = vld [vmem:[%s2 + $0x8] sm:$0xf]
  %v68 = vld [vmem:[%s3] sm:$0xf]
  %vm69 = vcmask 31744
  %v71 = vsel %vm69, %v50, 0
  %v74 = vsel %vm69, %v51, 0
  %v77 = vsel %vm69, %v52, 0
  %v80 = vsel %vm69, %v53, 0
  %v83 = vsel %vm69, %v54, 0
  %v86 = vsel %vm69, %v55, 0
  %v89 = vsel %vm69, %v56, 0
  %v92 = vsel %vm69, %v57, 0
  %v95 = vsel %vm69, %v58, 0
  %v98 = vsel %vm69, %v59, 0
  %v101 = vsel %vm69, %v60, 0
  %v104 = vsel %vm69, %v61, 0
  %v107 = vsel %vm69, %v62, 0
  %v110 = vsel %vm69, %v63, 0
  %v113 = vsel %vm69, %v64, 0
  %v116 = vsel %vm69, %v65, 0
  %vm118 = vcmask 1043456
  %v120 = vsel %vm118, %v68, 0
  %122 = vmatpush.msra.mxu0 0.0
  %123 = vmatpush.msra.mxu0 0.0
  %124 = vmatpush.msra.mxu0 0.0
  %125 = vmatpush.msra.mxu0 0.0
  %126 = vmatpush.msra.mxu0 0.0
  %127 = vmatpush.msra.mxu0 0.0
  %128 = vmatpush.msra.mxu0 0.0
  %129 = vmatpush.msra.mxu0 0.0
  %130 = vmatpush.msra.mxu0 0.0
  %131 = vmatpush.msra.mxu0 0.0
  %132 = vmatpush.msra.mxu0 0.0
  %133 = vmatpush.msra.mxu0 0.0
  %134 = vmatpush.msra.mxu0 0.0
  %135 = vmatpush.msra.mxu0 0.0
  %136 = vmatpush.msra.mxu0 0.0
  %137 = vmatpush.msra.mxu0 %v120
  %138 = vmatmul.f32.gmra.mxu0 %v71
  %v139 = vpop.f32.mrf.mxu0
  %v140 = vadd.f32 0.0, %v139
  %141 = vmatmul.f32.gmra.mxu0 %v74
  %v142 = vpop.f32.mrf.mxu0
  %v143 = vadd.f32 0.0, %v142
  %144 = vmatmul.f32.gmra.mxu0 %v77
  %v145 = vpop.f32.mrf.mxu0
  %v146 = vadd.f32 0.0, %v145
  %147 = vmatmul.f32.gmra.mxu0 %v80
  %v148 = vpop.f32.mrf.mxu0
  %v149 = vadd.f32 0.0, %v148
  %150 = vmatmul.f32.gmra.mxu0 %v83
  %v151 = vpop.f32.mrf.mxu0
  %v152 = vadd.f32 0.0, %v151
  %153 = vmatmul.f32.gmra.mxu0 %v86
  %v154 = vpop.f32.mrf.mxu0
  %v155 = vadd.f32 0.0, %v154
  %156 = vmatmul.f32.gmra.mxu0 %v89
  %v157 = vpop.f32.mrf.mxu0
  %v158 = vadd.f32 0.0, %v157
  %159 = vmatmul.f32.gmra.mxu0 %v92
  %v160 = vpop.f32.mrf.mxu0
  %v161 = vadd.f32 0.0, %v160
  %162 = vmatmul.f32.gmra.mxu0 %v95
  %v163 = vpop.f32.mrf.mxu0
  %v164 = vadd.f32 0.0, %v163
  %165 = vmatmul.f32.gmra.mxu0 %v98
  %v166 = vpop.f32.mrf.mxu0
  %v167 = vadd.f32 0.0, %v166
  %168 = vmatmul.f32.gmra.mxu0 %v101
  %v169 = vpop.f32.mrf.mxu0
  %v170 = vadd.f32 0.0, %v169
  %171 = vmatmul.f32.gmra.mxu0 %v104
  %v172 = vpop.f32.mrf.mxu0
  %v173 = vadd.f32 0.0, %v172
  %174 = vmatmul.f32.gmra.mxu0 %v107
  %v175 = vpop.f32.mrf.mxu0
  %v176 = vadd.f32 0.0, %v175
  %177 = vmatmul.f32.gmra.mxu0 %v110
  %v178 = vpop.f32.mrf.mxu0
  %v179 = vadd.f32 0.0, %v178
  %180 = vmatmul.f32.gmra.mxu0 %v113
  %v181 = vpop.f32.mrf.mxu0
  %v182 = vadd.f32 0.0, %v181
  %183 = vmatmul.f32.gmra.mxu0 %v116
  %v184 = vpop.f32.mrf.mxu0
  %v185 = vadd.f32 0.0, %v184
  %186 = vdwg.mxu0
  %vm187 = vcmask 97280
  %v189 = vsel %vm187, %v34, 0
  %v192 = vsel %vm187, %v35, 0
  %v195 = vsel %vm187, %v36, 0
  %v198 = vsel %vm187, %v37, 0
  %v201 = vsel %vm187, %v38, 0
  %v204 = vsel %vm187, %v39, 0
  %v207 = vsel %vm187, %v40, 0
  %v210 = vsel %vm187, %v41, 0
  %v213 = vsel %vm187, %v42, 0
  %v216 = vsel %vm187, %v43, 0
  %v219 = vsel %vm187, %v44, 0
  %v222 = vsel %vm187, %v45, 0
  %v225 = vsel %vm187, %v46, 0
  %v228 = vsel %vm187, %v47, 0
  %v231 = vsel %vm187, %v48, 0
  %v234 = vsel %vm187, %v49, 0
  %v237 = vsel %vm118, %v67, 0
  %239 = vmatpush.msra.mxu0 0.0
  %240 = vmatpush.msra.mxu0 0.0
  %241 = vmatpush.msra.mxu0 0.0
  %242 = vmatpush.msra.mxu0 0.0
  %243 = vmatpush.msra.mxu0 0.0
  %244 = vmatpush.msra.mxu0 0.0
  %245 = vmatpush.msra.mxu0 0.0
  %246 = vmatpush.msra.mxu0 0.0
  %247 = vmatpush.msra.mxu0 0.0
  %248 = vmatpush.msra.mxu0 0.0
  %249 = vmatpush.msra.mxu0 0.0
  %250 = vmatpush.msra.mxu0 0.0
  %251 = vmatpush.msra.mxu0 0.0
  %252 = vmatpush.msra.mxu0 0.0
  %253 = vmatpush.msra.mxu0 %v237
  %254 = vmatpush.msra.mxu0 %v66
  %255 = vmatmul.f32.gmra.mxu0 %v189
  %v256 = vpop.f32.mrf.mxu0
  %v257 = vadd.f32 %v140, %v256
  %258 = vmatmul.f32.gmra.mxu0 %v192
  %v259 = vpop.f32.mrf.mxu0
  %v260 = vadd.f32 %v143, %v259
  %261 = vmatmul.f32.gmra.mxu0 %v195
  %v262 = vpop.f32.mrf.mxu0
  %v263 = vadd.f32 %v146, %v262
  %264 = vmatmul.f32.gmra.mxu0 %v198
  %v265 = vpop.f32.mrf.mxu0
  %v266 = vadd.f32 %v149, %v265
  %267 = vmatmul.f32.gmra.mxu0 %v201
  %v268 = vpop.f32.mrf.mxu0
  %v269 = vadd.f32 %v152, %v268
  %270 = vmatmul.f32.gmra.mxu0 %v204
  %v271 = vpop.f32.mrf.mxu0
  %v272 = vadd.f32 %v155, %v271
  %273 = vmatmul.f32.gmra.mxu0 %v207
  %v274 = vpop.f32.mrf.mxu0
  %v275 = vadd.f32 %v158, %v274
  %276 = vmatmul.f32.gmra.mxu0 %v210
  %v277 = vpop.f32.mrf.mxu0
  %v278 = vadd.f32 %v161, %v277
  %279 = vmatmul.f32.gmra.mxu0 %v213
  %v280 = vpop.f32.mrf.mxu0
  %v281 = vadd.f32 %v164, %v280
  %282 = vmatmul.f32.gmra.mxu0 %v216
  %v283 = vpop.f32.mrf.mxu0
  %v284 = vadd.f32 %v167, %v283
  %285 = vmatmul.f32.gmra.mxu0 %v219
  %v286 = vpop.f32.mrf.mxu0
  %v287 = vadd.f32 %v170, %v286
  %288 = vmatmul.f32.gmra.mxu0 %v222
  %v289 = vpop.f32.mrf.mxu0
  %v290 = vadd.f32 %v173, %v289
  %291 = vmatmul.f32.gmra.mxu0 %v225
  %v292 = vpop.f32.mrf.mxu0
  %v293 = vadd.f32 %v176, %v292
  %294 = vmatmul.f32.gmra.mxu0 %v228
  %v295 = vpop.f32.mrf.mxu0
  %v296 = vadd.f32 %v179, %v295
  %297 = vmatmul.f32.gmra.mxu0 %v231
  %v298 = vpop.f32.mrf.mxu0
  %v299 = vadd.f32 %v182, %v298
  %300 = vmatmul.f32.gmra.mxu0 %v234
  %v301 = vpop.f32.mrf.mxu0
  %v302 = vadd.f32 %v185, %v301
  %303 = vdwg.mxu0
  %v304 = vld [vmem:[%s4] sm:$0x1]
  %v306 = vperm.slane %v304, 0
  %v308 = vadd.f32 %v257, %v306
  %v309 = vadd.f32 %v260, %v306
  %v310 = vadd.f32 %v263, %v306
  %v311 = vadd.f32 %v266, %v306
  %v312 = vadd.f32 %v269, %v306
  %v313 = vadd.f32 %v272, %v306
  %v314 = vadd.f32 %v275, %v306
  %v315 = vadd.f32 %v278, %v306
  %v316 = vadd.f32 %v281, %v306
  %v317 = vadd.f32 %v284, %v306
  %v318 = vadd.f32 %v287, %v306
  %v319 = vadd.f32 %v290, %v306
  %v320 = vadd.f32 %v293, %v306
  %v321 = vadd.f32 %v296, %v306
  %v322 = vadd.f32 %v299, %v306
  %v323 = vadd.f32 %v302, %v306
  %v324 = vmax.f32 %v308, 0.0
  %v325 = vmax.f32 %v309, 0.0
  %v326 = vmax.f32 %v310, 0.0
  %v327 = vmax.f32 %v311, 0.0
  %v328 = vmax.f32 %v312, 0.0
  %v329 = vmax.f32 %v313, 0.0
  %v330 = vmax.f32 %v314, 0.0
  %v331 = vmax.f32 %v315, 0.0
  %v332 = vmax.f32 %v316, 0.0
  %v333 = vmax.f32 %v317, 0.0
  %v334 = vmax.f32 %v318, 0.0
  %v335 = vmax.f32 %v319, 0.0
  %v336 = vmax.f32 %v320, 0.0
  %v337 = vmax.f32 %v321, 0.0
  %v338 = vmax.f32 %v322, 0.0
  %v339 = vmax.f32 %v323, 0.0
  %v340 = vld [vmem:[%s5] sm:$0xff]
  %v341 = vld [vmem:[%s5 + $0x8] sm:$0xff]
  %v342 = vld [vmem:[%s5 + $0x10] sm:$0xff]
  %v343 = vld [vmem:[%s5 + $0x18] sm:$0xff]
  %v344 = vld [vmem:[%s6] sm:$0x1]
  %v346 = vperm.slane %v344, 0
  %vm348 = vcmask 261120
  %v350 = vsel %vm348, %v324, 0
  %v353 = vsel %vm348, %v325, 0
  %v356 = vsel %vm348, %v326, 0
  %v359 = vsel %vm348, %v327, 0
  %v362 = vsel %vm348, %v328, 0
  %v365 = vsel %vm348, %v329, 0
  %v368 = vsel %vm348, %v330, 0
  %v371 = vsel %vm348, %v331, 0
  %v374 = vsel %vm348, %v332, 0
  %v377 = vsel %vm348, %v333, 0
  %v380 = vsel %vm348, %v334, 0
  %v383 = vsel %vm348, %v335, 0
  %v386 = vsel %vm348, %v336, 0
  %v389 = vsel %vm348, %v337, 0
  %v392 = vsel %vm348, %v338, 0
  %v395 = vsel %vm348, %v339, 0
  %397 = vmatpush.msra.mxu0 0.0
  %398 = vmatpush.msra.mxu0 0.0
  %399 = vmatpush.msra.mxu0 0.0
  %400 = vmatpush.msra.mxu0 0.0
  %401 = vmatpush.msra.mxu0 0.0
  %402 = vmatpush.msra.mxu0 0.0
  %403 = vmatpush.msra.mxu0 0.0
  %404 = vmatpush.msra.mxu0 0.0
  %405 = vmatpush.msra.mxu0 0.0
  %406 = vmatpush.msra.mxu0 0.0
  %407 = vmatpush.msra.mxu0 0.0
  %408 = vmatpush.msra.mxu0 0.0
  %409 = vmatpush.msra.mxu0 %v343
  %410 = vmatpush.msra.mxu0 %v342
  %411 = vmatpush.msra.mxu0 %v341
  %412 = vmatpush.msra.mxu0 %v340
  %413 = vmatmul.f32.gmra.mxu0 %v350
  %v414 = vpop.f32.mrf.mxu0
  %v415 = vadd.f32 %v346, %v414
  %416 = vmatmul.f32.gmra.mxu0 %v353
  %v417 = vpop.f32.mrf.mxu0
  %v418 = vadd.f32 %v346, %v417
  %419 = vmatmul.f32.gmra.mxu0 %v356
  %v420 = vpop.f32.mrf.mxu0
  %v421 = vadd.f32 %v346, %v420
  %422 = vmatmul.f32.gmra.mxu0 %v359
  %v423 = vpop.f32.mrf.mxu0
  %v424 = vadd.f32 %v346, %v423
  %425 = vmatmul.f32.gmra.mxu0 %v362
  %v426 = vpop.f32.mrf.mxu0
  %v427 = vadd.f32 %v346, %v426
  %428 = vmatmul.f32.gmra.mxu0 %v365
  %v429 = vpop.f32.mrf.mxu0
  %v430 = vadd.f32 %v346, %v429
  %431 = vmatmul.f32.gmra.mxu0 %v368
  %v432 = vpop.f32.mrf.mxu0
  %v433 = vadd.f32 %v346, %v432
  %434 = vmatmul.f32.gmra.mxu0 %v371
  %v435 = vpop.f32.mrf.mxu0
  %v436 = vadd.f32 %v346, %v435
  %437 = vmatmul.f32.gmra.mxu0 %v374
  %v438 = vpop.f32.mrf.mxu0
  %v439 = vadd.f32 %v346, %v438
  %440 = vmatmul.f32.gmra.mxu0 %v377
  %v441 = vpop.f32.mrf.mxu0
  %v442 = vadd.f32 %v346, %v441
  %443 = vmatmul.f32.gmra.mxu0 %v380
  %v444 = vpop.f32.mrf.mxu0
  %v445 = vadd.f32 %v346, %v444
  %446 = vmatmul.f32.gmra.mxu0 %v383
  %v447 = vpop.f32.mrf.mxu0
  %v448 = vadd.f32 %v346, %v447
  %449 = vmatmul.f32.gmra.mxu0 %v386
  %v450 = vpop.f32.mrf.mxu0
  %v451 = vadd.f32 %v346, %v450
  %452 = vmatmul.f32.gmra.mxu0 %v389
  %v453 = vpop.f32.mrf.mxu0
  %v454 = vadd.f32 %v346, %v453
  %455 = vmatmul.f32.gmra.mxu0 %v392
  %v456 = vpop.f32.mrf.mxu0
  %v457 = vadd.f32 %v346, %v456
  %458 = vmatmul.f32.gmra.mxu0 %v395
  %v459 = vpop.f32.mrf.mxu0
  %v460 = vadd.f32 %v346, %v459
  %461 = vdwg.mxu0
  %v462 = vmax.f32 %v415, 0.0
  %v463 = vmax.f32 %v418, 0.0
  %v464 = vmax.f32 %v421, 0.0
  %v465 = vmax.f32 %v424, 0.0
  %v466 = vmax.f32 %v427, 0.0
  %v467 = vmax.f32 %v430, 0.0
  %v468 = vmax.f32 %v433, 0.0
  %v469 = vmax.f32 %v436, 0.0
  %v470 = vmax.f32 %v439, 0.0
  %v471 = vmax.f32 %v442, 0.0
  %v472 = vmax.f32 %v445, 0.0
  %v473 = vmax.f32 %v448, 0.0
  %v474 = vmax.f32 %v451, 0.0
  %v475 = vmax.f32 %v454, 0.0
  %v476 = vmax.f32 %v457, 0.0
  %v477 = vmax.f32 %v460, 0.0
  %v478 = vld [vmem:[%s7] sm:$0xff]
  %v480 = vsel %vm348, %v478, 0
  %v483 = vsel %vm348, %v462, 0
  %v486 = vsel %vm348, %v463, 0
  %v489 = vsel %vm348, %v464, 0
  %v492 = vsel %vm348, %v465, 0
  %v495 = vsel %vm348, %v466, 0
  %v498 = vsel %vm348, %v467, 0
  %v501 = vsel %vm348, %v468, 0
  %v504 = vsel %vm348, %v469, 0
  %v507 = vsel %vm348, %v470, 0
  %v510 = vsel %vm348, %v471, 0
  %v513 = vsel %vm348, %v472, 0
  %v516 = vsel %vm348, %v473, 0
  %v519 = vsel %vm348, %v474, 0
  %v522 = vsel %vm348, %v475, 0
  %v525 = vsel %vm348, %v476, 0
  %v528 = vsel %vm348, %v477, 0
  %530 = vmatpush.xpose.msra.mxu0 %v528
  %531 = vmatpush.xpose.msra.mxu0 %v525
  %532 = vmatpush.xpose.msra.mxu0 %v522
  %533 = vmatpush.xpose.msra.mxu0 %v519
  %534 = vmatpush.xpose.msra.mxu0 %v516
  %535 = vmatpush.xpose.msra.mxu0 %v513
  %536 = vmatpush.xpose.msra.mxu0 %v510
  %537 = vmatpush.xpose.msra.mxu0 %v507
  %538 = vmatpush.xpose.msra.mxu0 %v504
  %539 = vmatpush.xpose.msra.mxu0 %v501
  %540 = vmatpush.xpose.msra.mxu0 %v498
  %541 = vmatpush.xpose.msra.mxu0 %v495
  %542 = vmatpush.xpose.msra.mxu0 %v492
  %543 = vmatpush.xpose.msra.mxu0 %v489
  %544 = vmatpush.xpose.msra.mxu0 %v486
  %545 = vmatpush.xpose.msra.mxu0 %v483
  %546 = vmatmul.f32.gmra.mxu0 %v480
  %v547 = vpop.f32.mrf.mxu0
  %v548 = vadd.f32 0.0, %v547
  %549 = vdwg.mxu0
  %v550 = vld [vmem:[#allocation2] sm:$0x1]
  %552 = vset.pattern.permute.xlu0 0
  %553 = vperm.xlu0 %552, %v550
  %v554 = vpop.permute.xlu0 %553
  %v556 = vperm.slane %v554, 0
  %v557 = vadd.f32 %v548, %v556
  %558 = vst [vmem:[%s9] sm:$0x1] %v557
  // Predicated region
  $region38: #{qnetwork_forward.1} parent=0 // pred_check
    _
  $region39: #{qnetwork_forward.1} parent=0 // pred_check_branch
    %560 = sbr.rel (0) target = $region41
  $region40: #{qnetwork_forward.1} parent=0 // pred_region
    _
  $region41: #{qnetwork_forward.1} parent=0 // pred_fallthru
    _
  // Predicated region
  $region42: #{qnetwork_forward.1} parent=0 // pred_check
    _
  $region43: #{qnetwork_forward.1} parent=0 // pred_check_branch
    %562 = sbr.rel (0) target = $region45
  $region44: #{qnetwork_forward.1} parent=0 // pred_region
    _
  $region45: #{qnetwork_forward.1} parent=0 // pred_fallthru
    _

</llo_original>
